<compile_context>
chip_gen: v5e
topology: v5e:2x2
jax: 0.10.0
libtpu: 0.0.40
codegen_flags: <defaults>
</compile_context>

<pallas_src>
import functools

import jax
import jax.numpy as jnp
from jax.experimental import pallas as pl
from jax.experimental.pallas import tpu as pltpu


def _round_up(x, m):
    return (x + m - 1) // m * m


def _build_adjacency(n_nodes, edge_index, train_mask):
    """Replicates the torch preamble: self loops + dense adjacency."""
    eyes = jnp.stack((jnp.arange(n_nodes), jnp.arange(n_nodes)))
    edge_index = jnp.concatenate((edge_index, eyes), axis=-1)
    adj = jnp.zeros((n_nodes, n_nodes), jnp.float32)
    adj = adj.at[edge_index[0], edge_index[1]].set(train_mask.astype(jnp.float32))
    diag = jnp.arange(n_nodes)
    adj = adj.at[diag, diag].set(1.0)
    return adj


def _gat_kernel(h_ref, w_ref, a_ref, bias_ref, out_ref, el_scr, *,
                n_heads, n_hidden, negative_slope, is_concat, tile_m):
    """One grid step == one tile of TM destination nodes i.

    h_ref    : [N_pad, F_in]   bf16, resident (neighbours j need their g_j)
    w_ref    : [F_in, H*Fh]    bf16, resident fc weight (transposed)
    a_ref    : [H*Fh, 2*H]     bf16, resident block-diagonal attention projection
    bias_ref : [TM, N_pad]     bf16, row tile of additive mask bias (0 / -1e30)
    out_ref  : [TM, out_dim]   f32
    el_scr   : [N_pad, H]      f32 VMEM scratch, rewritten every step (stateless)
    """
    i = pl.program_id(0)
    row0 = pl.multiple_of(i * tile_m, tile_m)

    # fc (no bias): g = h @ W for ALL nodes (aggregation gathers every neighbour).
    g = jnp.dot(h_ref[...], w_ref[...],
                preferred_element_type=jnp.float32).astype(jnp.bfloat16)    # [N, H*Fh]

    # Fused attention logits: one matmul for all heads and both halves.
    #   logits[:, h] = g_h @ a_l (el),  logits[:, H+h] = g_h @ a_r (er)
    logits = jnp.dot(g, a_ref[...], preferred_element_type=jnp.float32)     # [N, 2H]
    el_scr[...] = logits[:, :n_heads]                                       # [N, H]
    er_t = jnp.transpose(logits[:, n_heads:])                               # [H, N] (one XLU transpose)

    # Destination-node logits for this row tile only.
    el_tile = el_scr[pl.ds(row0, tile_m), :]                                # [TM, H]

    # Hoisted mask bias, shared across heads (computed once per tile).
    bias = bias_ref[...].astype(jnp.float32)                                # [TM, N]

    outs = []
    for hd in range(n_heads):
        e = el_tile[:, hd:hd + 1] + er_t[hd:hd + 1, :]                      # [TM, N]
        e = jnp.where(e >= 0.0, e, negative_slope * e)                      # LeakyReLU (pre-mask, as in torch)
        e = e + bias                                                        # masked_fill(adj == 0, -inf) equivalent
        m = jnp.max(e, axis=1, keepdims=True)
        p = jnp.exp(e - m)
        s = jnp.sum(p, axis=1, keepdims=True)
        attn = p * pl.reciprocal(s, approx=True)                            # softmax over neighbours j
        # TODO(synk): nn.Dropout(0.6) on the attention coefficients is an
        #             eval-mode identity and is intentionally skipped.
        out_h = jnp.dot(attn.astype(jnp.bfloat16),
                        g[:, hd * n_hidden:(hd + 1) * n_hidden],
                        preferred_element_type=jnp.float32)                 # [TM, Fh]
        outs.append(out_h)

    if is_concat:
        out_ref[...] = jnp.concatenate(outs, axis=1)                        # single lane-dense store
    else:
        acc = outs[0]
        for o in outs[1:]:
            acc = acc + o
        out_ref[...] = acc * (1.0 / n_heads)                                # single store, single divide


def gat_layer_forward(h, edge_index, train_mask, fc_weight, attn_weight, *,
                      n_heads, is_concat=True, negative_slope=0.2):
    """JAX/Pallas equivalent of GATLayer.forward (inference mode)."""
    n_nodes, in_features = h.shape
    total_out = fc_weight.shape[0]
    assert total_out % n_heads == 0
    n_hidden = total_out // n_heads
    hf = n_heads * n_hidden

    # ---- torch preamble (self loops + dense adjacency) ----
    adj = _build_adjacency(n_nodes, edge_index, train_mask)

    # ---- tiling (v7x-friendly: TM=128 row tiles at scale, full graph when tiny) ----
    tile_m = 128 if n_nodes >= 128 else _round_up(n_nodes, 8)
    n_pad = _round_up(n_nodes, tile_m)
    n_tiles = n_pad // tile_m

    # Additive mask bias in bf16 (half the bytes of f32 adj; finite -1e30
    # instead of -inf removes the all-masked-row NaN hazard).
    neg = jnp.float32(-1e30)
    bias = jnp.where(adj != 0.0, 0.0, neg)
    bias = jnp.pad(bias, ((0, n_pad - n_nodes), (0, n_pad - n_nodes)),
                   constant_values=neg).astype(jnp.bfloat16)

    # ---- parameter re-layout: bf16 MXU inputs + fused block-diagonal logit matrix ----
    h_p = jnp.pad(h.astype(jnp.float32),
                  ((0, n_pad - n_nodes), (0, 0))).astype(jnp.bfloat16)      # [N_pad, F_in]
    w = fc_weight.T.astype(jnp.bfloat16)                                    # [F_in, H*Fh]
    a = attn_weight.reshape(-1).astype(jnp.float32)                         # [2*Fh]
    a_l, a_r = a[:n_hidden], a[n_hidden:]
    A = jnp.zeros((hf, 2 * n_heads), jnp.float32)
    for hd in range(n_heads):
        A = A.at[hd * n_hidden:(hd + 1) * n_hidden, hd].set(a_l)
        A = A.at[hd * n_hidden:(hd + 1) * n_hidden, n_heads + hd].set(a_r)
    A = A.astype(jnp.bfloat16)

    out_dim = hf if is_concat else n_hidden
    kernel = functools.partial(
        _gat_kernel, n_heads=n_heads, n_hidden=n_hidden,
        negative_slope=negative_slope, is_concat=is_concat, tile_m=tile_m)

    grid_spec = pltpu.PrefetchScalarGridSpec(
        num_scalar_prefetch=0,
        grid=(n_tiles,),
        in_specs=[
            pl.BlockSpec((n_pad, in_features), lambda i: (0, 0)),   # h: resident
            pl.BlockSpec((in_features, hf), lambda i: (0, 0)),      # W: resident
            pl.BlockSpec((hf, 2 * n_heads), lambda i: (0, 0)),      # A: resident
            pl.BlockSpec((tile_m, n_pad), lambda i: (i, 0)),        # mask bias: row-tiled (pipelined)
        ],
        out_specs=pl.BlockSpec((tile_m, out_dim), lambda i: (i, 0)),
        scratch_shapes=[pltpu.VMEM((n_pad, n_heads), jnp.float32)],
    )

    flops = (n_tiles * (2 * n_pad * in_features * hf + 2 * n_pad * hf * 2 * n_heads)
             + 2 * n_heads * n_pad * n_pad * n_hidden)
    bytes_accessed = ((h_p.size + w.size + A.size) * 2
                      + bias.size * 2 + n_pad * out_dim * 4)
    cost = pl.CostEstimate(flops=flops,
                           transcendentals=n_heads * n_pad * n_pad,
                           bytes_accessed=bytes_accessed)

    out = pl.pallas_call(
        kernel,
        grid_spec=grid_spec,
        out_shape=jax.ShapeDtypeStruct((n_pad, out_dim), jnp.float32),
        compiler_params=pltpu.CompilerParams(
            dimension_semantics=("parallel",),
            vmem_limit_bytes=64 * 1024 * 1024),
        cost_estimate=cost,
    )(h_p, w, A, bias)
    return out[:n_nodes]


def _gat_reference(h, edge_index, train_mask, fc_weight, attn_weight, *,
                   n_heads, is_concat=True, negative_slope=0.2):
    """Pure-JAX f32 reference of the torch forward (eval mode)."""
    n_nodes = h.shape[0]
    n_hidden = fc_weight.shape[0] // n_heads
    adj = _build_adjacency(n_nodes, edge_index, train_mask)
    g = (h @ fc_weight.T).reshape(n_nodes, n_heads, n_hidden)
    a = attn_weight.reshape(-1)
    el = jnp.einsum('nhf,f->nh', g, a[:n_hidden])
    er = jnp.einsum('nhf,f->nh', g, a[n_hidden:])
    e = el[:, None, :] + er[None, :, :]
    e = jnp.where(e >= 0.0, e, negative_slope * e)
    e = jnp.where(adj[:, :, None] == 0.0, -jnp.inf, e)
    attn = jax.nn.softmax(e, axis=1)
    out = jnp.einsum('ijh,jhf->ihf', attn, g)
    if is_concat:
        return out.reshape(n_nodes, n_heads * n_hidden)
    return out.mean(axis=1)


if __name__ == "__main__":
    key = jax.random.PRNGKey(0)
    n_nodes, in_features, out_features, n_heads = 16, 32, 32, 4
    n_hidden = out_features // n_heads
    n_edges = 48

    k1, k2, k3, k4, k5 = jax.random.split(key, 5)
    h = jax.random.normal(k1, (n_nodes, in_features), jnp.float32)
    edge_index = jax.random.randint(k2, (2, n_edges), 0, n_nodes)
    # train_mask is indexed against edge_index AFTER the self-loop concat in the
    # torch forward, so it has length n_edges + n_nodes.
    train_mask = jax.random.bernoulli(k3, 0.8, (n_edges + n_nodes,)).astype(jnp.float32)

    # Deterministic "parameters" matching nn.Linear shapes:
    #   fc.weight      : [n_heads*n_hidden, in_features]
    #   attn_fc.weight : [1, 2*n_hidden]
    fc_weight = 0.1 * jax.random.normal(k4, (n_heads * n_hidden, in_features), jnp.float32)
    attn_weight = 0.1 * jax.random.normal(k5, (1, 2 * n_hidden), jnp.float32)

    out = gat_layer_forward(h, edge_index, train_mask, fc_weight, attn_weight,
                            n_heads=n_heads, is_concat=True)
    out = jax.block_until_ready(out)
    assert out.shape == (n_nodes, n_heads * n_hidden)
    assert bool(jnp.all(jnp.isfinite(out)))

    ref = _gat_reference(h, edge_index, train_mask, fc_weight, attn_weight,
                         n_heads=n_heads, is_concat=True, negative_slope=0.2)
    assert bool(jnp.allclose(out, ref, rtol=5e-2, atol=5e-2)), \
        float(jnp.max(jnp.abs(out - ref)))
    print("KERNEL_OK")
</pallas_src>

<mosaic_0001>
module attributes {stable_mosaic.version = 11 : i64} {
  func.func @_gat_kernel(%arg0: i32, %arg1: memref<16x32xbf16, #tpu.memory_space<vmem>>, %arg2: memref<32x32xbf16, #tpu.memory_space<vmem>>, %arg3: memref<32x8xbf16, #tpu.memory_space<vmem>>, %arg4: memref<16x16xbf16, #tpu.memory_space<vmem>>, %arg5: memref<16x32xf32, #tpu.memory_space<vmem>>, %arg6: memref<16x4xf32, #tpu.memory_space<vmem>>) attributes {dimension_semantics = [#tpu.dimension_semantics<parallel>], iteration_bounds = array<i64: 1>, scalar_prefetch = 0 : i64, scratch_operands = 1 : i64, tpu.core_type = #tpu.core_type<tc>, window_params = [{pipeline_mode = #tpu.pipeline_mode<synchronous>, transform_indices = @transform_0, window_bounds = array<i64: 16, 32>}, {pipeline_mode = #tpu.pipeline_mode<synchronous>, transform_indices = @transform_1, window_bounds = array<i64: 32, 32>}, {pipeline_mode = #tpu.pipeline_mode<synchronous>, transform_indices = @transform_2, window_bounds = array<i64: 32, 8>}, {transform_indices = @transform_3, window_bounds = array<i64: 16, 16>}, {transform_indices = @transform_4, window_bounds = array<i64: 16, 32>}]} {
    %c16_i32 = arith.constant 16 : i32
    %0 = arith.muli %arg0, %c16_i32 : i32
    %1 = tpu.assume_multiple %0, 16 : i32
    %c0 = arith.constant 0 : index
    %c0_0 = arith.constant 0 : index
    %2 = vector.load %arg1[%c0, %c0_0] : memref<16x32xbf16, #tpu.memory_space<vmem>>, vector<16x32xbf16>
    %c0_1 = arith.constant 0 : index
    %c0_2 = arith.constant 0 : index
    %3 = vector.load %arg2[%c0_1, %c0_2] : memref<32x32xbf16, #tpu.memory_space<vmem>>, vector<32x32xbf16>
    %cst = arith.constant dense<0.000000e+00> : vector<16x32xf32>
    %4 = tpu.matmul %2, %3, %cst {dimension_numbers = #tpu.dot_dimension_numbers<[1], [0], [0], [1], [0, 0, 1, 1], [], []>} : vector<16x32xbf16>, vector<32x32xbf16>, vector<16x32xf32> -> vector<16x32xf32>
    %5 = arith.truncf %4 : vector<16x32xf32> to vector<16x32xbf16>
    %c0_3 = arith.constant 0 : index
    %c0_4 = arith.constant 0 : index
    %6 = vector.load %arg3[%c0_3, %c0_4] : memref<32x8xbf16, #tpu.memory_space<vmem>>, vector<32x8xbf16>
    %cst_5 = arith.constant dense<0.000000e+00> : vector<16x8xf32>
    %7 = tpu.matmul %5, %6, %cst_5 {dimension_numbers = #tpu.dot_dimension_numbers<[1], [0], [0], [1], [0, 0, 1, 1], [], []>} : vector<16x32xbf16>, vector<32x8xbf16>, vector<16x8xf32> -> vector<16x8xf32>
    %8 = vector.extract_strided_slice %7 {offsets = [0, 0], sizes = [16, 4], strides = [1, 1]} : vector<16x8xf32> to vector<16x4xf32>
    %c0_6 = arith.constant 0 : index
    %c0_7 = arith.constant 0 : index
    %9 = vector.load %arg6[%c0_6, %c0_7] : memref<16x4xf32, #tpu.memory_space<vmem>>, vector<16x4xf32>
    tpu.vector_store %arg6[%c0_6, %c0_7], %8 {strides = array<i32>} : memref<16x4xf32, #tpu.memory_space<vmem>>, vector<16x4xf32>,
    %10 = vector.extract_strided_slice %7 {offsets = [0, 4], sizes = [16, 4], strides = [1, 1]} : vector<16x8xf32> to vector<16x4xf32>
    %11 = tpu.transpose %10, [1, 0] : vector<16x4xf32> -> vector<4x16xf32>
    %12 = arith.index_cast %1 : i32 to index
    %c0_8 = arith.constant 0 : index
    %13 = vector.load %arg6[%12, %c0_8] : memref<16x4xf32, #tpu.memory_space<vmem>>, vector<16x4xf32>
    %c0_9 = arith.constant 0 : index
    %c0_10 = arith.constant 0 : index
    %14 = vector.load %arg4[%c0_9, %c0_10] : memref<16x16xbf16, #tpu.memory_space<vmem>>, vector<16x16xbf16>
    %15 = arith.extf %14 : vector<16x16xbf16> to vector<16x16xf32>
    %16 = vector.extract_strided_slice %13 {offsets = [0, 0], sizes = [16, 1], strides = [1, 1]} : vector<16x4xf32> to vector<16x1xf32>
    %17 = vector.extract_strided_slice %11 {offsets = [0, 0], sizes = [1, 16], strides = [1, 1]} : vector<4x16xf32> to vector<1x16xf32>
    %18 = vector.broadcast %16 : vector<16x1xf32> to vector<16x16xf32>
    %19 = vector.broadcast %17 : vector<1x16xf32> to vector<16x16xf32>
    %20 = arith.addf %18, %19 : vector<16x16xf32>
    %cst_11 = arith.constant 0.000000e+00 : f32
    %21 = vector.broadcast %cst_11 : f32 to vector<16x16xf32>
    %22 = arith.cmpf oge, %20, %21 : vector<16x16xf32>
    %cst_12 = arith.constant 2.000000e-01 : f32
    %23 = vector.broadcast %cst_12 : f32 to vector<16x16xf32>
    %24 = arith.mulf %23, %20 : vector<16x16xf32>
    %25 = arith.select %22, %20, %24 : vector<16x16xi1>, vector<16x16xf32>
    %26 = arith.addf %25, %15 : vector<16x16xf32>
    %cst_13 = arith.constant dense<0xFF800000> : vector<16xf32>
    %27 = vector.multi_reduction <maximumf>, %26, %cst_13 [1] : vector<16x16xf32> to vector<16xf32>
    %28 = vector.shape_cast %27 : vector<16xf32> to vector<16x1xf32>
    %29 = vector.broadcast %28 : vector<16x1xf32> to vector<16x16xf32>
    %30 = arith.subf %26, %29 : vector<16x16xf32>
    %31 = math.exp %30 : vector<16x16xf32>
    %cst_14 = arith.constant dense<0.000000e+00> : vector<16xf32>
    %32 = vector.multi_reduction <add>, %31, %cst_14 [1] : vector<16x16xf32> to vector<16xf32>
    %33 = vector.shape_cast %32 : vector<16xf32> to vector<16x1xf32>
    %34 = tpu.reciprocal %33 {approx = true} : vector<16x1xf32> -> vector<16x1xf32>
    %35 = vector.broadcast %34 : vector<16x1xf32> to vector<16x16xf32>
    %36 = arith.mulf %31, %35 : vector<16x16xf32>
    %37 = arith.truncf %36 : vector<16x16xf32> to vector<16x16xbf16>
    %38 = vector.extract_strided_slice %5 {offsets = [0, 0], sizes = [16, 8], strides = [1, 1]} : vector<16x32xbf16> to vector<16x8xbf16>
    %cst_15 = arith.constant dense<0.000000e+00> : vector<16x8xf32>
    %39 = tpu.matmul %37, %38, %cst_15 {dimension_numbers = #tpu.dot_dimension_numbers<[1], [0], [0], [1], [0, 0, 1, 1], [], []>} : vector<16x16xbf16>, vector<16x8xbf16>, vector<16x8xf32> -> vector<16x8xf32>
    %40 = vector.extract_strided_slice %13 {offsets = [0, 1], sizes = [16, 1], strides = [1, 1]} : vector<16x4xf32> to vector<16x1xf32>
    %41 = vector.extract_strided_slice %11 {offsets = [1, 0], sizes = [1, 16], strides = [1, 1]} : vector<4x16xf32> to vector<1x16xf32>
    %42 = vector.broadcast %40 : vector<16x1xf32> to vector<16x16xf32>
    %43 = vector.broadcast %41 : vector<1x16xf32> to vector<16x16xf32>
    %44 = arith.addf %42, %43 : vector<16x16xf32>
    %cst_16 = arith.constant 0.000000e+00 : f32
    %45 = vector.broadcast %cst_16 : f32 to vector<16x16xf32>
    %46 = arith.cmpf oge, %44, %45 : vector<16x16xf32>
    %cst_17 = arith.constant 2.000000e-01 : f32
    %47 = vector.broadcast %cst_17 : f32 to vector<16x16xf32>
    %48 = arith.mulf %47, %44 : vector<16x16xf32>
    %49 = arith.select %46, %44, %48 : vector<16x16xi1>, vector<16x16xf32>
    %50 = arith.addf %49, %15 : vector<16x16xf32>
    %cst_18 = arith.constant dense<0xFF800000> : vector<16xf32>
    %51 = vector.multi_reduction <maximumf>, %50, %cst_18 [1] : vector<16x16xf32> to vector<16xf32>
    %52 = vector.shape_cast %51 : vector<16xf32> to vector<16x1xf32>
    %53 = vector.broadcast %52 : vector<16x1xf32> to vector<16x16xf32>
    %54 = arith.subf %50, %53 : vector<16x16xf32>
    %55 = math.exp %54 : vector<16x16xf32>
    %cst_19 = arith.constant dense<0.000000e+00> : vector<16xf32>
    %56 = vector.multi_reduction <add>, %55, %cst_19 [1] : vector<16x16xf32> to vector<16xf32>
    %57 = vector.shape_cast %56 : vector<16xf32> to vector<16x1xf32>
    %58 = tpu.reciprocal %57 {approx = true} : vector<16x1xf32> -> vector<16x1xf32>
    %59 = vector.broadcast %58 : vector<16x1xf32> to vector<16x16xf32>
    %60 = arith.mulf %55, %59 : vector<16x16xf32>
    %61 = arith.truncf %60 : vector<16x16xf32> to vector<16x16xbf16>
    %62 = vector.extract_strided_slice %5 {offsets = [0, 8], sizes = [16, 8], strides = [1, 1]} : vector<16x32xbf16> to vector<16x8xbf16>
    %cst_20 = arith.constant dense<0.000000e+00> : vector<16x8xf32>
    %63 = tpu.matmul %61, %62, %cst_20 {dimension_numbers = #tpu.dot_dimension_numbers<[1], [0], [0], [1], [0, 0, 1, 1], [], []>} : vector<16x16xbf16>, vector<16x8xbf16>, vector<16x8xf32> -> vector<16x8xf32>
    %64 = vector.extract_strided_slice %13 {offsets = [0, 2], sizes = [16, 1], strides = [1, 1]} : vector<16x4xf32> to vector<16x1xf32>
    %65 = vector.extract_strided_slice %11 {offsets = [2, 0], sizes = [1, 16], strides = [1, 1]} : vector<4x16xf32> to vector<1x16xf32>
    %66 = vector.broadcast %64 : vector<16x1xf32> to vector<16x16xf32>
    %67 = vector.broadcast %65 : vector<1x16xf32> to vector<16x16xf32>
    %68 = arith.addf %66, %67 : vector<16x16xf32>
    %cst_21 = arith.constant 0.000000e+00 : f32
    %69 = vector.broadcast %cst_21 : f32 to vector<16x16xf32>
    %70 = arith.cmpf oge, %68, %69 : vector<16x16xf32>
    %cst_22 = arith.constant 2.000000e-01 : f32
    %71 = vector.broadcast %cst_22 : f32 to vector<16x16xf32>
    %72 = arith.mulf %71, %68 : vector<16x16xf32>
    %73 = arith.select %70, %68, %72 : vector<16x16xi1>, vector<16x16xf32>
    %74 = arith.addf %73, %15 : vector<16x16xf32>
    %cst_23 = arith.constant dense<0xFF800000> : vector<16xf32>
    %75 = vector.multi_reduction <maximumf>, %74, %cst_23 [1] : vector<16x16xf32> to vector<16xf32>
    %76 = vector.shape_cast %75 : vector<16xf32> to vector<16x1xf32>
    %77 = vector.broadcast %76 : vector<16x1xf32> to vector<16x16xf32>
    %78 = arith.subf %74, %77 : vector<16x16xf32>
    %79 = math.exp %78 : vector<16x16xf32>
    %cst_24 = arith.constant dense<0.000000e+00> : vector<16xf32>
    %80 = vector.multi_reduction <add>, %79, %cst_24 [1] : vector<16x16xf32> to vector<16xf32>
    %81 = vector.shape_cast %80 : vector<16xf32> to vector<16x1xf32>
    %82 = tpu.reciprocal %81 {approx = true} : vector<16x1xf32> -> vector<16x1xf32>
    %83 = vector.broadcast %82 : vector<16x1xf32> to vector<16x16xf32>
    %84 = arith.mulf %79, %83 : vector<16x16xf32>
    %85 = arith.truncf %84 : vector<16x16xf32> to vector<16x16xbf16>
    %86 = vector.extract_strided_slice %5 {offsets = [0, 16], sizes = [16, 8], strides = [1, 1]} : vector<16x32xbf16> to vector<16x8xbf16>
    %cst_25 = arith.constant dense<0.000000e+00> : vector<16x8xf32>
    %87 = tpu.matmul %85, %86, %cst_25 {dimension_numbers = #tpu.dot_dimension_numbers<[1], [0], [0], [1], [0, 0, 1, 1], [], []>} : vector<16x16xbf16>, vector<16x8xbf16>, vector<16x8xf32> -> vector<16x8xf32>
    %88 = vector.extract_strided_slice %13 {offsets = [0, 3], sizes = [16, 1], strides = [1, 1]} : vector<16x4xf32> to vector<16x1xf32>
    %89 = vector.extract_strided_slice %11 {offsets = [3, 0], sizes = [1, 16], strides = [1, 1]} : vector<4x16xf32> to vector<1x16xf32>
    %90 = vector.broadcast %88 : vector<16x1xf32> to vector<16x16xf32>
    %91 = vector.broadcast %89 : vector<1x16xf32> to vector<16x16xf32>
    %92 = arith.addf %90, %91 : vector<16x16xf32>
    %cst_26 = arith.constant 0.000000e+00 : f32
    %93 = vector.broadcast %cst_26 : f32 to vector<16x16xf32>
    %94 = arith.cmpf oge, %92, %93 : vector<16x16xf32>
    %cst_27 = arith.constant 2.000000e-01 : f32
    %95 = vector.broadcast %cst_27 : f32 to vector<16x16xf32>
    %96 = arith.mulf %95, %92 : vector<16x16xf32>
    %97 = arith.select %94, %92, %96 : vector<16x16xi1>, vector<16x16xf32>
    %98 = arith.addf %97, %15 : vector<16x16xf32>
    %cst_28 = arith.constant dense<0xFF800000> : vector<16xf32>
    %99 = vector.multi_reduction <maximumf>, %98, %cst_28 [1] : vector<16x16xf32> to vector<16xf32>
    %100 = vector.shape_cast %99 : vector<16xf32> to vector<16x1xf32>
    %101 = vector.broadcast %100 : vector<16x1xf32> to vector<16x16xf32>
    %102 = arith.subf %98, %101 : vector<16x16xf32>
    %103 = math.exp %102 : vector<16x16xf32>
    %cst_29 = arith.constant dense<0.000000e+00> : vector<16xf32>
    %104 = vector.multi_reduction <add>, %103, %cst_29 [1] : vector<16x16xf32> to vector<16xf32>
    %105 = vector.shape_cast %104 : vector<16xf32> to vector<16x1xf32>
    %106 = tpu.reciprocal %105 {approx = true} : vector<16x1xf32> -> vector<16x1xf32>
    %107 = vector.broadcast %106 : vector<16x1xf32> to vector<16x16xf32>
    %108 = arith.mulf %103, %107 : vector<16x16xf32>
    %109 = arith.truncf %108 : vector<16x16xf32> to vector<16x16xbf16>
    %110 = vector.extract_strided_slice %5 {offsets = [0, 24], sizes = [16, 8], strides = [1, 1]} : vector<16x32xbf16> to vector<16x8xbf16>
    %cst_30 = arith.constant dense<0.000000e+00> : vector<16x8xf32>
    %111 = tpu.matmul %109, %110, %cst_30 {dimension_numbers = #tpu.dot_dimension_numbers<[1], [0], [0], [1], [0, 0, 1, 1], [], []>} : vector<16x16xbf16>, vector<16x8xbf16>, vector<16x8xf32> -> vector<16x8xf32>
    %112 = tpu.concatenate %39, %63, %87, %111 in 1 : vector<16x8xf32>, vector<16x8xf32>, vector<16x8xf32>, vector<16x8xf32> -> vector<16x32xf32>
    %c0_31 = arith.constant 0 : index
    %c0_32 = arith.constant 0 : index
    %113 = vector.load %arg5[%c0_31, %c0_32] : memref<16x32xf32, #tpu.memory_space<vmem>>, vector<16x32xf32>
    tpu.vector_store %arg5[%c0_31, %c0_32], %112 {strides = array<i32>} : memref<16x32xf32, #tpu.memory_space<vmem>>, vector<16x32xf32>,
    return
  }
  func.func @transform_0(%arg0: i32) -> (i32, i32) {
    %c0_i32 = arith.constant 0 : i32
    %c0_i32_0 = arith.constant 0 : i32
    %c0_i32_1 = arith.constant 0 : i32
    return %c0_i32, %c0_i32_0 : i32, i32
  }
  func.func @transform_1(%arg0: i32) -> (i32, i32) {
    %c0_i32 = arith.constant 0 : i32
    %c0_i32_0 = arith.constant 0 : i32
    %c0_i32_1 = arith.constant 0 : i32
    return %c0_i32, %c0_i32_0 : i32, i32
  }
  func.func @transform_2(%arg0: i32) -> (i32, i32) {
    %c0_i32 = arith.constant 0 : i32
    %c0_i32_0 = arith.constant 0 : i32
    %c0_i32_1 = arith.constant 0 : i32
    return %c0_i32, %c0_i32_0 : i32, i32
  }
  func.func @transform_3(%arg0: i32) -> (i32, i32) {
    %c0_i32 = arith.constant 0 : i32
    %c0_i32_0 = arith.constant 0 : i32
    return %arg0, %c0_i32 : i32, i32
  }
  func.func @transform_4(%arg0: i32) -> (i32, i32) {
    %c0_i32 = arith.constant 0 : i32
    %c0_i32_0 = arith.constant 0 : i32
    return %arg0, %c0_i32 : i32, i32
  }
}

</mosaic_0001>

<llo_original>
// kernel: tpu_custom_call.1
$region0: #{tpu_custom_call.1}
  #allocation0 [shape = 'u32[]', space=smem, size = 0x4, offset = 0x4, fixed_abs, tag = 'smem constant byte address 0x4 - core index']
  #allocation1 [shape = 'u32[72,128]{1,0:T(1,128)}', space=vmem, size = 0x9000, scoped, tag = 'internal scratch']
  #allocation2 [shape = 'f32[16,4]{1,0:T(8,128)}', space=vmem, size = 0x2000, scoped, tag = 'scratch operand']
  %s0 = inlined_call_operand.hbm [shape: bf16[16,32], index: 0, kind: input, shape index: {}]
  %s1 = inlined_call_operand.vmem [shape: bf16[32,32], index: 1, kind: input, shape index: {}]
  %s2 = inlined_call_operand.vmem [shape: bf16[32,8], index: 2, kind: input, shape index: {}]
  %s3 = inlined_call_operand.hbm [shape: bf16[16,16], index: 3, kind: input, shape index: {}]
  %s4 = inlined_call_operand.hbm [shape: f32[16,32], index: 4, kind: output, shape index: {}]
  %s5 = sld [smem:[#allocation0]]
  $region34: #{tpu_custom_call.1} parent=0
    _
  %s7 = ssub.s32 1, %s5
  %s8 = scalar_select 0, %s7, %s5
  $region1: #{tpu_custom_call.1} parent=0
    #allocation3 [shape = 'u8[4096]{0}', space=vmem, size = 0x1000, scoped, tag = 'input window, operand 0, single buffered']
    #allocation4 [shape = 's32[1]{0}', space=sflag, size = 0x4, scoped, tag = 'scoped memory for tpu_custom_call.1']
    #allocation5 [shape = 's32[1]{0}', space=sflag, size = 0x4, scoped, tag = 'scoped memory for tpu_custom_call.1']
    #allocation6 [shape = 'u8[4096]{0}', space=vmem, size = 0x1000, scoped, tag = 'input window, operand 3, single buffered']
    #allocation7 [shape = 's32[1]{0}', space=sflag, size = 0x4, scoped, tag = 'scoped memory for tpu_custom_call.1']
    #allocation8 [shape = 'u8[8192]{0}', space=vmem, size = 0x2000, scoped, tag = 'output window, operand 0, single buffered']
    %9 = vsyncpa [#allocation4], 0
    %10 = vsyncpa [#allocation7], 0
    %11 = vsyncpa [#allocation5], 0
    // Predicated region
    $region2: #{tpu_custom_call.1} parent=1 // pred_check
      _
    $region3: #{tpu_custom_call.1} parent=1 // pred_check_branch
      %13 = sbr.rel (0) target = $region5
    $region4: #{tpu_custom_call.1} parent=1 // pred_region
      %15 = vsyncadd [#allocation4], 0
      %s16 = sshll.u32 %s0, 4
      %s17 = int_to_ptr.hbm [resolvable:$true] %s16
      %s18 = sshll.u32 [#allocation3], 4
      %s19 = int_to_ptr.vmem [resolvable:$true] %s18
      %24 = dma.hbm_to_vmem [thread:$0]  %s17, 128, %s19, [#allocation4], 64, 64, 4
    $region5: #{tpu_custom_call.1} parent=1 // pred_fallthru
      _
    // Predicated region
    $region6: #{tpu_custom_call.1} parent=1 // pred_check
      _
    $region7: #{tpu_custom_call.1} parent=1 // pred_check_branch
      %26 = sbr.rel (0) target = $region9
    $region8: #{tpu_custom_call.1} parent=1 // pred_region
      _
    $region9: #{tpu_custom_call.1} parent=1 // pred_fallthru
      _
    // Predicated region
    $region10: #{tpu_custom_call.1} parent=1 // pred_check
      _
    $region11: #{tpu_custom_call.1} parent=1 // pred_check_branch
      %28 = sbr.rel (0) target = $region13
    $region12: #{tpu_custom_call.1} parent=1 // pred_region
      _
    $region13: #{tpu_custom_call.1} parent=1 // pred_fallthru
      _
    // Predicated region
    $region14: #{tpu_custom_call.1} parent=1 // pred_check
      _
    $region15: #{tpu_custom_call.1} parent=1 // pred_check_branch
      %30 = sbr.rel (0) target = $region17
    $region16: #{tpu_custom_call.1} parent=1 // pred_region
      %32 = vsyncadd [#allocation7], 0
      %s33 = sshll.u32 %s3, 4
      %s34 = int_to_ptr.hbm [resolvable:$true] %s33
      %s35 = sshll.u32 [#allocation6], 4
      %s36 = int_to_ptr.vmem [resolvable:$true] %s35
      %41 = dma.hbm_to_vmem [thread:$0]  %s34, 128, %s36, [#allocation7], 64, 64, 4
    $region17: #{tpu_custom_call.1} parent=1 // pred_fallthru
      _
    // Predicated region
    $region18: #{tpu_custom_call.1} parent=1 // pred_check
      _
    $region19: #{tpu_custom_call.1} parent=1 // pred_check_branch
      %43 = sbr.rel (0) target = $region21
    $region20: #{tpu_custom_call.1} parent=1 // pred_region
      %45 = dma.done [#allocation4], 128
    $region21: #{tpu_custom_call.1} parent=1 // pred_fallthru
      _
    // Predicated region
    $region22: #{tpu_custom_call.1} parent=1 // pred_check
      _
    $region23: #{tpu_custom_call.1} parent=1 // pred_check_branch
      %47 = sbr.rel (0) target = $region25
    $region24: #{tpu_custom_call.1} parent=1 // pred_region
      %49 = dma.done [#allocation7], 128
    $region25: #{tpu_custom_call.1} parent=1 // pred_fallthru
      _
    %s51 = smul.u32 0, 16
    %v52 = vld [vmem:[#allocation3] sm:$0xf]
    %v53 = vld [vmem:[#allocation3 + $0x4] sm:$0xf]
    %v54 = vld [vmem:[%s1] sm:$0xf]
    %v55 = vld [vmem:[%s1 + $0x4] sm:$0xf]
    %v56 = vld [vmem:[%s1 + $0x8] sm:$0xf]
    %v57 = vld [vmem:[%s1 + $0xc] sm:$0xf]
    %v60 = vunpack.c.l.b16 %v52
    %v61 = vunpack.c.l.b16 %v53
    %v62 = vpack.c.b16 %v61, %v60
    %v67 = vunpack.c.l.b16 %v54
    %v68 = vunpack.c.l.b16 %v55
    %v69 = vunpack.c.l.b16 %v56
    %v70 = vunpack.c.l.b16 %v57
    %v71 = vpack.c.b16 %v68, %v67
    %v72 = vpack.c.b16 %v70, %v69
    %vm75 = vcmask 261120
    %v77 = vsel %vm75, %v62, 0
    %79 = vmatpush.bf16.msra.mxu0 0
    %80 = vmatpush.bf16.msra.mxu0 0
    %81 = vmatpush.bf16.msra.mxu0 0
    %82 = vmatpush.bf16.msra.mxu0 0
    %83 = vmatpush.bf16.msra.mxu0 0
    %84 = vmatpush.bf16.msra.mxu0 0
    %85 = vmatpush.bf16.msra.mxu0 %v72
    %86 = vmatpush.bf16.msra.mxu0 %v71
    %87 = vmatmul.bf16.gmra.mxu0 %v77
    %v88 = vpop.f32.mrf.mxu0
    %v89 = vadd.f32 0.0, %v88
    %v90 = vpop.f32.mrf.mxu0
    %v91 = vadd.f32 0.0, %v90
    %92 = vdwg.mxu0
    %v93 = vpack.c.bf16 %v89, %v89
    %v94 = vpack.c.bf16 %v91, %v91
    %v95 = vld [vmem:[%s2] sm:$0xf]
    %v96 = vld [vmem:[%s2 + $0x4] sm:$0xf]
    %v97 = vld [vmem:[%s2 + $0x8] sm:$0xf]
    %v98 = vld [vmem:[%s2 + $0xc] sm:$0xf]
    %v101 = vunpack.c.l.b16 %v93
    %v102 = vunpack.c.l.b16 %v94
    %v103 = vpack.c.b16 %v102, %v101
    %v108 = vunpack.c.l.b16 %v95
    %v109 = vunpack.c.l.b16 %v96
    %v110 = vunpack.c.l.b16 %v97
    %v111 = vunpack.c.l.b16 %v98
    %v112 = vpack.c.b16 %v109, %v108
    %v113 = vpack.c.b16 %v111, %v110
    %v117 = vsel %vm75, %v103, 0
    %119 = vmatpush.bf16.msra.mxu0 0
    %120 = vmatpush.bf16.msra.mxu0 0
    %121 = vmatpush.bf16.msra.mxu0 0
    %122 = vmatpush.bf16.msra.mxu0 0
    %123 = vmatpush.bf16.msra.mxu0 0
    %124 = vmatpush.bf16.msra.mxu0 0
    %125 = vmatpush.bf16.msra.mxu0 %v113
    %126 = vmatpush.bf16.msra.mxu0 %v112
    %127 = vmatmul.bf16.gmra.mxu0 %v117
    %v128 = vpop.f32.mrf.mxu0
    %v129 = vadd.f32 0.0, %v128
    %v130 = vpop.f32.mrf.mxu0
    %v131 = vadd.f32 0.0, %v130
    %132 = vdwg.mxu0
    %vm133 = vcmask 31744
    %134 = vst.msk [vmem:[#allocation2] sm:$0xff] %vm133, %v129
    %135 = vst.msk [vmem:[#allocation2 + $0x8] sm:$0xff] %vm133, %v131
    %138 = vrot.lane.b32.xlu0 %v129, 124
    %v139 = vpop.permute.xlu0 %138
    %140 = vrot.lane.b32.xlu0 %v131, 124
    %v141 = vpop.permute.xlu0 %140
    %144 = vxpose.xlu0.b32.start [1/16] %v139, 128
    %145 = vxpose.xlu0.b32.cont [2/16] %v141, 128
    %146 = vxpose.xlu0.b32.cont [3/16] 0.0, 128
    %147 = vxpose.xlu0.b32.cont [4/16] 0.0, 128
    %148 = vxpose.xlu0.b32.cont [5/16] 0.0, 128
    %149 = vxpose.xlu0.b32.cont [6/16] 0.0, 128
    %150 = vxpose.xlu0.b32.cont [7/16] 0.0, 128
    %151 = vxpose.xlu0.b32.cont [8/16] 0.0, 128
    %152 = vxpose.xlu0.b32.cont [9/16] 0.0, 128
    %153 = vxpose.xlu0.b32.cont [10/16] 0.0, 128
    %154 = vxpose.xlu0.b32.cont [11/16] 0.0, 128
    %155 = vxpose.xlu0.b32.cont [12/16] 0.0, 128
    %156 = vxpose.xlu0.b32.cont [13/16] 0.0, 128
    %157 = vxpose.xlu0.b32.cont [14/16] 0.0, 128
    %158 = vxpose.xlu0.b32.cont [15/16] 0.0, 128
    %159 = vxpose.xlu0.b32.end [16/16] 0.0, 128
    %v160 = vpop.trf.xlu0
    %v161 = vpop.trf.xlu0
    %v162 = vpop.trf.xlu0
    %v163 = vpop.trf.xlu0
    %v164 = vpop.trf.xlu0
    %v165 = vpop.trf.xlu0
    %v166 = vpop.trf.xlu0
    %v167 = vpop.trf.xlu0
    %v168 = vpop.trf.xlu0
    %v169 = vpop.trf.xlu0
    %v170 = vpop.trf.xlu0
    %v171 = vpop.trf.xlu0
    %v172 = vpop.trf.xlu0
    %v173 = vpop.trf.xlu0
    %v174 = vpop.trf.xlu0
    %v175 = vpop.trf.xlu0
    %s176 = scalar_lea.vmem [#allocation2], %s51
    %v177 = vld [vmem:[%s176] sm:$0xff]
    %v178 = vld [vmem:[%s176 + $0x8] sm:$0xff]
    %v179 = vld [vmem:[#allocation6] sm:$0xf]
    %v180 = vld [vmem:[#allocation6 + $0x4] sm:$0xf]
    %v181 = vunpack.c.l.bf16 %v179
    %v182 = vunpack.c.l.bf16 %v180
    %184 = vset.pattern.permute.xlu0 0
    %185 = vperm.xlu0 %184, %v177
    %v186 = vpop.permute.xlu0 %185
    %189 = vset.pattern.permute.xlu0 0
    %190 = vperm.xlu0 %189, %v178
    %v191 = vpop.permute.xlu0 %190
    %v193 = vperm.slane %v160, 0
    %v194 = vadd.f32 %v186, %v193
    %v195 = vadd.f32 %v191, %v193
    %vm196 = vcmp.ge.f32.partialorder %v194, 0.0
    %vm197 = vcmp.ge.f32.partialorder %v195, 0.0
    %v198 = vmul.f32 %v194, 0.2
    %v199 = vmul.f32 %v195, 0.2
    %v200 = vsel %vm196, %v194, %v198
    %v201 = vsel %vm197, %v195, %v199
    %v202 = vadd.f32 %v200, %v181
    %v203 = vadd.f32 %v201, %v182
    %vm204 = vcmask 130048
    %v205 = vsel %vm204, %v202, -inf
    %206 = vmax.xlane.f32.xlu0 %v205
    %v207 = vpop.xlane.xlu0 %206
    %v208 = vsel %vm204, %v203, -inf
    %209 = vmax.xlane.f32.xlu0 %v208
    %v210 = vpop.xlane.xlu0 %209
    %v211 = vsub.f32 %v202, %v207
    %v212 = vsub.f32 %v203, %v210
    %v213 = vmul.f32 %v211, 1.442695
    %v214 = vpow.pop %v213
    %v215 = vmul.f32 %v212, 1.442695
    %v216 = vpow.pop %v215
    %v217 = vsel %vm204, %v214, 0.0
    %218 = vadd.xlane.f32.xlu0 %v217
    %v219 = vpop.xlane.xlu0 %218
    %v220 = vsel %vm204, %v216, 0.0
    %221 = vadd.xlane.f32.xlu0 %v220
    %v222 = vpop.xlane.xlu0 %221
    %v223 = vrcp.pop %v219
    %v224 = vrcp.pop %v222
    %v225 = vmul.f32 %v214, %v223
    %v226 = vmul.f32 %v216, %v224
    %v227 = vpack.c.bf16 %v226, %v225
    %v230 = vsel %vm204, %v227, 0
    %232 = vmatpush.bf16.msra.mxu0 0
    %233 = vmatpush.bf16.msra.mxu0 0
    %234 = vmatpush.bf16.msra.mxu0 0
    %235 = vmatpush.bf16.msra.mxu0 0
    %236 = vmatpush.bf16.msra.mxu0 0
    %237 = vmatpush.bf16.msra.mxu0 0
    %238 = vmatpush.bf16.msra.mxu0 0
    %239 = vmatpush.bf16.msra.mxu0 %v103
    %240 = vmatmul.bf16.gmra.mxu0 %v230
    %v241 = vpop.f32.mrf.mxu0
    %v242 = vadd.f32 0.0, %v241
    %v243 = vpop.f32.mrf.mxu0
    %v244 = vadd.f32 0.0, %v243
    %245 = vdwg.mxu0
    %246 = vset.pattern.permute.xlu0 1
    %247 = vperm.xlu0 %246, %v177
    %v248 = vpop.permute.xlu0 %247
    %250 = vset.pattern.permute.xlu0 1
    %251 = vperm.xlu0 %250, %v178
    %v252 = vpop.permute.xlu0 %251
    %v254 = vperm.slane %v160, 1
    %v255 = vadd.f32 %v248, %v254
    %v256 = vadd.f32 %v252, %v254
    %vm257 = vcmp.ge.f32.partialorder %v255, 0.0
    %vm258 = vcmp.ge.f32.partialorder %v256, 0.0
    %v259 = vmul.f32 %v255, 0.2
    %v260 = vmul.f32 %v256, 0.2
    %v261 = vsel %vm257, %v255, %v259
    %v262 = vsel %vm258, %v256, %v260
    %v263 = vadd.f32 %v261, %v181
    %v264 = vadd.f32 %v262, %v182
    %v265 = vsel %vm204, %v263, -inf
    %266 = vmax.xlane.f32.xlu0 %v265
    %v267 = vpop.xlane.xlu0 %266
    %v268 = vsel %vm204, %v264, -inf
    %269 = vmax.xlane.f32.xlu0 %v268
    %v270 = vpop.xlane.xlu0 %269
    %v271 = vsub.f32 %v263, %v267
    %v272 = vsub.f32 %v264, %v270
    %v273 = vmul.f32 %v271, 1.442695
    %v274 = vpow.pop %v273
    %v275 = vmul.f32 %v272, 1.442695
    %v276 = vpow.pop %v275
    %v277 = vsel %vm204, %v274, 0.0
    %278 = vadd.xlane.f32.xlu0 %v277
    %v279 = vpop.xlane.xlu0 %278
    %v280 = vsel %vm204, %v276, 0.0
    %281 = vadd.xlane.f32.xlu0 %v280
    %v282 = vpop.xlane.xlu0 %281
    %v283 = vrcp.pop %v279
    %v284 = vrcp.pop %v282
    %v285 = vmul.f32 %v274, %v283
    %v286 = vmul.f32 %v276, %v284
    %v287 = vpack.c.bf16 %v286, %v285
    %288 = vrot.lane.b32.xlu0 %v103, 120
    %v289 = vpop.permute.xlu0 %288
    %v292 = vsel %vm204, %v287, 0
    %294 = vmatpush.bf16.msra.mxu0 0
    %295 = vmatpush.bf16.msra.mxu0 0
    %296 = vmatpush.bf16.msra.mxu0 0
    %297 = vmatpush.bf16.msra.mxu0 0
    %298 = vmatpush.bf16.msra.mxu0 0
    %299 = vmatpush.bf16.msra.mxu0 0
    %300 = vmatpush.bf16.msra.mxu0 0
    %301 = vmatpush.bf16.msra.mxu0 %v289
    %302 = vmatmul.bf16.gmra.mxu0 %v292
    %v303 = vpop.f32.mrf.mxu0
    %v304 = vadd.f32 0.0, %v303
    %v305 = vpop.f32.mrf.mxu0
    %v306 = vadd.f32 0.0, %v305
    %307 = vdwg.mxu0
    %308 = vset.pattern.permute.xlu0 2
    %309 = vperm.xlu0 %308, %v177
    %v310 = vpop.permute.xlu0 %309
    %312 = vset.pattern.permute.xlu0 2
    %313 = vperm.xlu0 %312, %v178
    %v314 = vpop.permute.xlu0 %313
    %v316 = vperm.slane %v160, 2
    %v317 = vadd.f32 %v310, %v316
    %v318 = vadd.f32 %v314, %v316
    %vm319 = vcmp.ge.f32.partialorder %v317, 0.0
    %vm320 = vcmp.ge.f32.partialorder %v318, 0.0
    %v321 = vmul.f32 %v317, 0.2
    %v322 = vmul.f32 %v318, 0.2
    %v323 = vsel %vm319, %v317, %v321
    %v324 = vsel %vm320, %v318, %v322
    %v325 = vadd.f32 %v323, %v181
    %v326 = vadd.f32 %v324, %v182
    %v327 = vsel %vm204, %v325, -inf
    %328 = vmax.xlane.f32.xlu0 %v327
    %v329 = vpop.xlane.xlu0 %328
    %v330 = vsel %vm204, %v326, -inf
    %331 = vmax.xlane.f32.xlu0 %v330
    %v332 = vpop.xlane.xlu0 %331
    %v333 = vsub.f32 %v325, %v329
    %v334 = vsub.f32 %v326, %v332
    %v335 = vmul.f32 %v333, 1.442695
    %v336 = vpow.pop %v335
    %v337 = vmul.f32 %v334, 1.442695
    %v338 = vpow.pop %v337
    %v339 = vsel %vm204, %v336, 0.0
    %340 = vadd.xlane.f32.xlu0 %v339
    %v341 = vpop.xlane.xlu0 %340
    %v342 = vsel %vm204, %v338, 0.0
    %343 = vadd.xlane.f32.xlu0 %v342
    %v344 = vpop.xlane.xlu0 %343
    %v345 = vrcp.pop %v341
    %v346 = vrcp.pop %v344
    %v347 = vmul.f32 %v336, %v345
    %v348 = vmul.f32 %v338, %v346
    %v349 = vpack.c.bf16 %v348, %v347
    %350 = vrot.lane.b32.xlu0 %v103, 112
    %v351 = vpop.permute.xlu0 %350
    %v354 = vsel %vm204, %v349, 0
    %356 = vmatpush.bf16.msra.mxu0 0
    %357 = vmatpush.bf16.msra.mxu0 0
    %358 = vmatpush.bf16.msra.mxu0 0
    %359 = vmatpush.bf16.msra.mxu0 0
    %360 = vmatpush.bf16.msra.mxu0 0
    %361 = vmatpush.bf16.msra.mxu0 0
    %362 = vmatpush.bf16.msra.mxu0 0
    %363 = vmatpush.bf16.msra.mxu0 %v351
    %364 = vmatmul.bf16.gmra.mxu0 %v354
    %v365 = vpop.f32.mrf.mxu0
    %v366 = vadd.f32 0.0, %v365
    %v367 = vpop.f32.mrf.mxu0
    %v368 = vadd.f32 0.0, %v367
    %369 = vdwg.mxu0
    %370 = vset.pattern.permute.xlu0 3
    %371 = vperm.xlu0 %370, %v177
    %v372 = vpop.permute.xlu0 %371
    %374 = vset.pattern.permute.xlu0 3
    %375 = vperm.xlu0 %374, %v178
    %v376 = vpop.permute.xlu0 %375
    %v378 = vperm.slane %v160, 3
    %v379 = vadd.f32 %v372, %v378
    %v380 = vadd.f32 %v376, %v378
    %vm381 = vcmp.ge.f32.partialorder %v379, 0.0
    %vm382 = vcmp.ge.f32.partialorder %v380, 0.0
    %v383 = vmul.f32 %v379, 0.2
    %v384 = vmul.f32 %v380, 0.2
    %v385 = vsel %vm381, %v379, %v383
    %v386 = vsel %vm382, %v380, %v384
    %v387 = vadd.f32 %v385, %v181
    %v388 = vadd.f32 %v386, %v182
    %v389 = vsel %vm204, %v387, -inf
    %390 = vmax.xlane.f32.xlu0 %v389
    %v391 = vpop.xlane.xlu0 %390
    %v392 = vsel %vm204, %v388, -inf
    %393 = vmax.xlane.f32.xlu0 %v392
    %v394 = vpop.xlane.xlu0 %393
    %v395 = vsub.f32 %v387, %v391
    %v396 = vsub.f32 %v388, %v394
    %v397 = vmul.f32 %v395, 1.442695
    %v398 = vpow.pop %v397
    %v399 = vmul.f32 %v396, 1.442695
    %v400 = vpow.pop %v399
    %v401 = vsel %vm204, %v398, 0.0
    %402 = vadd.xlane.f32.xlu0 %v401
    %v403 = vpop.xlane.xlu0 %402
    %v404 = vsel %vm204, %v400, 0.0
    %405 = vadd.xlane.f32.xlu0 %v404
    %v406 = vpop.xlane.xlu0 %405
    %v407 = vrcp.pop %v403
    %v408 = vrcp.pop %v406
    %v409 = vmul.f32 %v398, %v407
    %v410 = vmul.f32 %v400, %v408
    %v411 = vpack.c.bf16 %v410, %v409
    %412 = vrot.lane.b32.xlu0 %v103, 104
    %v413 = vpop.permute.xlu0 %412
    %v416 = vsel %vm204, %v411, 0
    %418 = vmatpush.bf16.msra.mxu0 0
    %419 = vmatpush.bf16.msra.mxu0 0
    %420 = vmatpush.bf16.msra.mxu0 0
    %421 = vmatpush.bf16.msra.mxu0 0
    %422 = vmatpush.bf16.msra.mxu0 0
    %423 = vmatpush.bf16.msra.mxu0 0
    %424 = vmatpush.bf16.msra.mxu0 0
    %425 = vmatpush.bf16.msra.mxu0 %v413
    %426 = vmatmul.bf16.gmra.mxu0 %v416
    %v427 = vpop.f32.mrf.mxu0
    %v428 = vadd.f32 0.0, %v427
    %v429 = vpop.f32.mrf.mxu0
    %v430 = vadd.f32 0.0, %v429
    %431 = vdwg.mxu0
    %434 = vrot.lane.b32.xlu0 %v304, 8
    %v435 = vpop.permute.xlu0 %434
    %436 = vrot.lane.b32.xlu0 %v306, 8
    %v437 = vpop.permute.xlu0 %436
    %442 = vrot.lane.b32.xlu0 %v366, 16
    %v443 = vpop.permute.xlu0 %442
    %444 = vrot.lane.b32.xlu0 %v368, 16
    %v445 = vpop.permute.xlu0 %444
    %450 = vrot.lane.b32.xlu0 %v428, 24
    %v451 = vpop.permute.xlu0 %450
    %452 = vrot.lane.b32.xlu0 %v430, 24
    %v453 = vpop.permute.xlu0 %452
    %vm456 = vcmask 64512
    %v457 = vsel %vm456, %v242, %v435
    %v458 = vsel %vm456, %v244, %v437
    %v459 = vsel %vm204, %v457, %v443
    %v460 = vsel %vm204, %v458, %v445
    %vm461 = vcmask 195584
    %v462 = vsel %vm461, %v459, %v451
    %v463 = vsel %vm461, %v460, %v453
    %464 = vst.msk [vmem:[#allocation8] sm:$0xff] %vm75, %v462
    %465 = vst.msk [vmem:[#allocation8 + $0x8] sm:$0xff] %vm75, %v463
    // Predicated region
    $region26: #{tpu_custom_call.1} parent=1 // pred_check
      _
    $region27: #{tpu_custom_call.1} parent=1 // pred_check_branch
      %467 = sbr.rel (0) target = $region29
    $region28: #{tpu_custom_call.1} parent=1 // pred_region
      %469 = vsyncadd [#allocation5], 0
      %s470 = sshll.u32 [#allocation8], 4
      %s471 = int_to_ptr.vmem [resolvable:$true] %s470
      %s472 = sshll.u32 %s4, 4
      %s473 = int_to_ptr.hbm [resolvable:$true] %s472
      %478 = dma.vmem_to_hbm [thread:$0]  %s471, 256, %s473, [#allocation5], 128, 128, 8
    $region29: #{tpu_custom_call.1} parent=1 // pred_fallthru
      _
    // Predicated region
    $region30: #{tpu_custom_call.1} parent=1 // pred_check
      _
    $region31: #{tpu_custom_call.1} parent=1 // pred_check_branch
      %480 = sbr.rel (0) target = $region33
    $region32: #{tpu_custom_call.1} parent=1 // pred_region
      %482 = dma.done [#allocation5], 256
    $region33: #{tpu_custom_call.1} parent=1 // pred_fallthru
      _
    %483 = vsyncpa [#allocation4], 1
    %484 = vsyncpa [#allocation7], 1
    %485 = vsyncpa [#allocation5], 1

</llo_original>
